<compile_context>
chip_gen: v7x
topology: tpu7x:2x2x1
jax: 0.10.0
libtpu: 0.0.40
codegen_flags: <defaults>
</compile_context>

<pallas_src>
import functools

import jax
import jax.numpy as jnp
from jax.experimental import pallas as pl
from jax.experimental.pallas import tpu as pltpu


# ---------------------------------------------------------------------------
# Kernel
# ---------------------------------------------------------------------------
def _twin_critic_kernel(state_ref, action_ref, w_ref, q_ref, *,
                        state_dim, action_dim, hidden_dim, offs):
    """Fused twin-critic forward.

    state_ref  : (TB, S)  f32
    action_ref : (TB, A)  f32
    w_ref      : (R, 2H)  bf16 packed slab (weights + biases, see pack_params)
    q_ref      : (TB, 2)  f32   column 0 = q1, column 1 = q2
    """
    H2 = 2 * hidden_dim

    # bf16 dot operands (MXU-native); accumulation stays f32.
    s = state_ref[...].astype(jnp.bfloat16)
    a = action_ref[...].astype(jnp.bfloat16)

    # Static views into the packed slab (free; offsets are 16-row aligned).
    w1s = w_ref[offs["w1s"]:offs["w1s"] + state_dim, :]
    w1a = w_ref[offs["w1a"]:offs["w1a"] + action_dim, :]
    w2 = w_ref[offs["w2"]:offs["w2"] + H2, :]
    w3 = w_ref[offs["w3"]:offs["w3"] + H2, :]
    b = w_ref[offs["b"]:offs["b"] + 3, :].astype(jnp.float32)   # VPU work in f32

    # Layer 1 (concat-free): sa @ [W1|W4] == state @ W1s + action @ W1a
    h = (jnp.dot(s, w1s, preferred_element_type=jnp.float32)
         + jnp.dot(a, w1a, preferred_element_type=jnp.float32)
         + b[0:1, :])
    h = jnp.maximum(h, 0.0)

    # Layer 2 (fused block-diagonal): branches stay independent.
    h = jnp.dot(h.astype(jnp.bfloat16), w2,
                preferred_element_type=jnp.float32) + b[1:2, :]
    h = jnp.maximum(h, 0.0)

    # Layer 3 (fused heads): only lanes 0/1 of the padded weight are non-zero.
    q = jnp.dot(h.astype(jnp.bfloat16), w3, preferred_element_type=jnp.float32)
    q_ref[...] = (q[:, 0:2] + b[2:3, 0:2]).astype(q_ref.dtype)


# ---------------------------------------------------------------------------
# Parameter packing (done once, outside the forward hot path)
# ---------------------------------------------------------------------------
def pack_params(params, state_dim, action_dim, hidden_dim):
    """Fuse the six Linear layers into a single bf16 (R, 2H) slab."""
    (w1, b1, w2, b2, w3, b3, w4, b4, w5, b5, w6, b6) = params
    H = hidden_dim
    H2 = 2 * H

    def rup16(n):  # 16-row alignment (bf16 sublane tiling)
        return -(-n // 16) * 16

    off_w1s = 0
    off_w1a = off_w1s + rup16(state_dim)
    off_w2 = off_w1a + rup16(action_dim)
    off_w3 = off_w2 + H2
    off_b = off_w3 + H2
    total_rows = off_b + 16

    slab = jnp.zeros((total_rows, H2), jnp.float32)

    # Layer 1: [W1 | W4] split by input rows (state / action).
    w1f = jnp.concatenate([w1, w4], axis=1)                       # (S+A, 2H)
    slab = slab.at[off_w1s:off_w1s + state_dim, :].set(w1f[:state_dim])
    slab = slab.at[off_w1a:off_w1a + action_dim, :].set(w1f[state_dim:])

    # Layer 2: block-diag(W2, W5).
    slab = slab.at[off_w2:off_w2 + H, 0:H].set(w2)
    slab = slab.at[off_w2 + H:off_w2 + H2, H:H2].set(w5)

    # Layer 3: [[W3, 0], [0, W6]] padded to 2H lanes (only lanes 0/1 used).
    slab = slab.at[off_w3:off_w3 + H, 0:1].set(w3)
    slab = slab.at[off_w3 + H:off_w3 + H2, 1:2].set(w6)

    # Biases: row 0 = b1|b4, row 1 = b2|b5, row 2 lanes 0/1 = (b3, b6).
    slab = slab.at[off_b, :].set(jnp.concatenate([b1, b4], axis=1)[0])
    slab = slab.at[off_b + 1, :].set(jnp.concatenate([b2, b5], axis=1)[0])
    slab = slab.at[off_b + 2, 0].set(b3[0, 0])
    slab = slab.at[off_b + 2, 1].set(b6[0, 0])

    offs = dict(w1s=off_w1s, w1a=off_w1a, w2=off_w2, w3=off_w3, b=off_b)
    return slab.astype(jnp.bfloat16), offs


# ---------------------------------------------------------------------------
# Forward wrapper
# ---------------------------------------------------------------------------
def critic_forward(state, action, slab, offs, *, hidden_dim):
    """Pallas twin-critic forward. Returns q of shape (B, 2) float32
    (column 0 = q1, column 1 = q2)."""
    B, S = state.shape
    A = action.shape[1]
    H2 = 2 * hidden_dim
    R = slab.shape[0]

    # Batch tile: full batch for small B; 512 rows (multiple of 8, good MXU
    # M-dim utilization) for training-scale batches.
    TB = B if B <= 512 else 512
    grid = (pl.cdiv(B, TB),)

    kernel = functools.partial(_twin_critic_kernel, state_dim=S, action_dim=A,
                               hidden_dim=hidden_dim, offs=offs)

    flops = 2 * B * ((S + A) * H2 + H2 * H2 + H2 * 2)
    bytes_accessed = (state.size + action.size + B * 2) * 4 + slab.size * 2

    q = pl.pallas_call(
        kernel,
        out_shape=jax.ShapeDtypeStruct((B, 2), jnp.float32),
        grid=grid,
        in_specs=[
            pl.BlockSpec((TB, S), lambda i: (i, 0)),   # activations pipelined
            pl.BlockSpec((TB, A), lambda i: (i, 0)),
            pl.BlockSpec((R, H2), lambda i: (0, 0)),   # weight slab resident
        ],
        out_specs=pl.BlockSpec((TB, 2), lambda i: (i, 0)),
        compiler_params=pltpu.CompilerParams(
            dimension_semantics=("parallel",)),         # v7x: 2 TCs split batch
        cost_estimate=pl.CostEstimate(flops=flops, transcendentals=0,
                                      bytes_accessed=bytes_accessed),
    )(state, action, slab)
    return q


# ---------------------------------------------------------------------------
# Init + pure-JAX reference (mirrors the PyTorch module exactly)
# ---------------------------------------------------------------------------
def init_params(key, state_dim, action_dim, hidden_dim):
    """Deterministic synthetic init (PyTorch-Linear-like uniform fan-in)."""
    in_dim = state_dim + action_dim

    def linear(k, fan_in, fan_out):
        k1, k2 = jax.random.split(k)
        bound = 1.0 / jnp.sqrt(fan_in)
        # Stored as (in, out): transpose of torch's (out, in) weight.
        w = jax.random.uniform(k1, (fan_in, fan_out), jnp.float32, -bound, bound)
        b = jax.random.uniform(k2, (1, fan_out), jnp.float32, -bound, bound)
        return w, b

    keys = jax.random.split(key, 6)
    w1, b1 = linear(keys[0], in_dim, hidden_dim)
    w2, b2 = linear(keys[1], hidden_dim, hidden_dim)
    w3, b3 = linear(keys[2], hidden_dim, 1)
    w4, b4 = linear(keys[3], in_dim, hidden_dim)
    w5, b5 = linear(keys[4], hidden_dim, hidden_dim)
    w6, b6 = linear(keys[5], hidden_dim, 1)
    return (w1, b1, w2, b2, w3, b3, w4, b4, w5, b5, w6, b6)


def critic_reference(state, action, params):
    """Pure-JAX reference mirroring the PyTorch forward."""
    (w1, b1, w2, b2, w3, b3, w4, b4, w5, b5, w6, b6) = params
    sa = jnp.concatenate([state, action], axis=1)
    q1 = jnp.maximum(sa @ w1 + b1, 0.0)
    q1 = jnp.maximum(q1 @ w2 + b2, 0.0)
    q1 = q1 @ w3 + b3
    q2 = jnp.maximum(sa @ w4 + b4, 0.0)
    q2 = jnp.maximum(q2 @ w5 + b5, 0.0)
    q2 = q2 @ w6 + b6
    return q1, q2


# ---------------------------------------------------------------------------
# Smoke test
# ---------------------------------------------------------------------------
if __name__ == "__main__":
    state_dim, action_dim, hidden_dim = 12, 4, 32
    batch = 8

    root = jax.random.PRNGKey(0)
    k_params, k_state, k_action = jax.random.split(root, 3)

    params = init_params(k_params, state_dim, action_dim, hidden_dim)
    slab, offs = pack_params(params, state_dim, action_dim, hidden_dim)
    slab = jax.block_until_ready(slab)

    state = jax.random.normal(k_state, (batch, state_dim), jnp.float32)
    action = jax.random.normal(k_action, (batch, action_dim), jnp.float32)

    q = critic_forward(state, action, slab, offs, hidden_dim=hidden_dim)
    q = jax.block_until_ready(q)

    # Cheap views of the lane-dense (B, 2) result.
    q1, q2 = q[:, 0:1], q[:, 1:2]

    q1_ref, q2_ref = critic_reference(state, action, params)
    assert q.shape == (batch, 2)
    # bf16 weights / dot operands with f32 accumulation -> relaxed tolerance.
    assert jnp.allclose(q1, q1_ref, atol=2e-2, rtol=2e-2)
    assert jnp.allclose(q2, q2_ref, atol=2e-2, rtol=2e-2)

    print("KERNEL_OK")
</pallas_src>

<mosaic_0001>
module attributes {stable_mosaic.version = 11 : i64} {
  func.func @_twin_critic_kernel(%arg0: i32, %arg1: memref<8x12xf32, #tpu.memory_space<vmem>>, %arg2: memref<8x4xf32, #tpu.memory_space<vmem>>, %arg3: memref<176x64xbf16, #tpu.memory_space<vmem>>, %arg4: memref<8x2xf32, #tpu.memory_space<vmem>>) attributes {dimension_semantics = [#tpu.dimension_semantics<parallel>], iteration_bounds = array<i64: 1>, scalar_prefetch = 0 : i64, scratch_operands = 0 : i64, tpu.core_type = #tpu.core_type<tc>, window_params = [{transform_indices = @transform_0, window_bounds = array<i64: 8, 12>}, {transform_indices = @transform_1, window_bounds = array<i64: 8, 4>}, {pipeline_mode = #tpu.pipeline_mode<synchronous>, transform_indices = @transform_2, window_bounds = array<i64: 176, 64>}, {transform_indices = @transform_3, window_bounds = array<i64: 8, 2>}]} {
    %c0 = arith.constant 0 : index
    %c0_0 = arith.constant 0 : index
    %0 = vector.load %arg1[%c0, %c0_0] : memref<8x12xf32, #tpu.memory_space<vmem>>, vector<8x12xf32>
    %1 = arith.truncf %0 : vector<8x12xf32> to vector<8x12xbf16>
    %c0_1 = arith.constant 0 : index
    %c0_2 = arith.constant 0 : index
    %2 = vector.load %arg2[%c0_1, %c0_2] : memref<8x4xf32, #tpu.memory_space<vmem>>, vector<8x4xf32>
    %3 = arith.truncf %2 : vector<8x4xf32> to vector<8x4xbf16>
    %c0_3 = arith.constant 0 : index
    %c0_4 = arith.constant 0 : index
    %4 = vector.load %arg3[%c0_3, %c0_4] : memref<176x64xbf16, #tpu.memory_space<vmem>>, vector<12x64xbf16>
    %c16 = arith.constant 16 : index
    %c0_5 = arith.constant 0 : index
    %5 = vector.load %arg3[%c16, %c0_5] : memref<176x64xbf16, #tpu.memory_space<vmem>>, vector<4x64xbf16>
    %c32 = arith.constant 32 : index
    %c0_6 = arith.constant 0 : index
    %6 = vector.load %arg3[%c32, %c0_6] : memref<176x64xbf16, #tpu.memory_space<vmem>>, vector<64x64xbf16>
    %c96 = arith.constant 96 : index
    %c0_7 = arith.constant 0 : index
    %7 = vector.load %arg3[%c96, %c0_7] : memref<176x64xbf16, #tpu.memory_space<vmem>>, vector<64x64xbf16>
    %c160 = arith.constant 160 : index
    %c0_8 = arith.constant 0 : index
    %8 = vector.load %arg3[%c160, %c0_8] : memref<176x64xbf16, #tpu.memory_space<vmem>>, vector<3x64xbf16>
    %9 = arith.extf %8 : vector<3x64xbf16> to vector<3x64xf32>
    %cst = arith.constant dense<0.000000e+00> : vector<8x64xf32>
    %10 = tpu.matmul %1, %4, %cst {dimension_numbers = #tpu.dot_dimension_numbers<[1], [0], [0], [1], [0, 0, 1, 1], [], []>} : vector<8x12xbf16>, vector<12x64xbf16>, vector<8x64xf32> -> vector<8x64xf32>
    %cst_9 = arith.constant dense<0.000000e+00> : vector<8x64xf32>
    %11 = tpu.matmul %3, %5, %cst_9 {dimension_numbers = #tpu.dot_dimension_numbers<[1], [0], [0], [1], [0, 0, 1, 1], [], []>} : vector<8x4xbf16>, vector<4x64xbf16>, vector<8x64xf32> -> vector<8x64xf32>
    %12 = arith.addf %10, %11 : vector<8x64xf32>
    %13 = vector.extract_strided_slice %9 {offsets = [0, 0], sizes = [1, 64], strides = [1, 1]} : vector<3x64xf32> to vector<1x64xf32>
    %14 = vector.broadcast %13 : vector<1x64xf32> to vector<8x64xf32>
    %15 = arith.addf %12, %14 : vector<8x64xf32>
    %cst_10 = arith.constant 0.000000e+00 : f32
    %16 = vector.broadcast %cst_10 : f32 to vector<8x64xf32>
    %17 = arith.maximumf %15, %16 : vector<8x64xf32>
    %18 = arith.truncf %17 : vector<8x64xf32> to vector<8x64xbf16>
    %cst_11 = arith.constant dense<0.000000e+00> : vector<8x64xf32>
    %19 = tpu.matmul %18, %6, %cst_11 {dimension_numbers = #tpu.dot_dimension_numbers<[1], [0], [0], [1], [0, 0, 1, 1], [], []>} : vector<8x64xbf16>, vector<64x64xbf16>, vector<8x64xf32> -> vector<8x64xf32>
    %20 = vector.extract_strided_slice %9 {offsets = [1, 0], sizes = [1, 64], strides = [1, 1]} : vector<3x64xf32> to vector<1x64xf32>
    %21 = vector.broadcast %20 : vector<1x64xf32> to vector<8x64xf32>
    %22 = arith.addf %19, %21 : vector<8x64xf32>
    %cst_12 = arith.constant 0.000000e+00 : f32
    %23 = vector.broadcast %cst_12 : f32 to vector<8x64xf32>
    %24 = arith.maximumf %22, %23 : vector<8x64xf32>
    %25 = arith.truncf %24 : vector<8x64xf32> to vector<8x64xbf16>
    %cst_13 = arith.constant dense<0.000000e+00> : vector<8x64xf32>
    %26 = tpu.matmul %25, %7, %cst_13 {dimension_numbers = #tpu.dot_dimension_numbers<[1], [0], [0], [1], [0, 0, 1, 1], [], []>} : vector<8x64xbf16>, vector<64x64xbf16>, vector<8x64xf32> -> vector<8x64xf32>
    %27 = vector.extract_strided_slice %26 {offsets = [0, 0], sizes = [8, 2], strides = [1, 1]} : vector<8x64xf32> to vector<8x2xf32>
    %28 = vector.extract_strided_slice %9 {offsets = [2, 0], sizes = [1, 2], strides = [1, 1]} : vector<3x64xf32> to vector<1x2xf32>
    %29 = vector.broadcast %28 : vector<1x2xf32> to vector<8x2xf32>
    %30 = arith.addf %27, %29 : vector<8x2xf32>
    %c0_14 = arith.constant 0 : index
    %c0_15 = arith.constant 0 : index
    %31 = vector.load %arg4[%c0_14, %c0_15] : memref<8x2xf32, #tpu.memory_space<vmem>>, vector<8x2xf32>
    tpu.vector_store %arg4[%c0_14, %c0_15], %30 {strides = array<i32>} : memref<8x2xf32, #tpu.memory_space<vmem>>, vector<8x2xf32>,
    return
  }
  func.func @transform_0(%arg0: i32) -> (i32, i32) {
    %c0_i32 = arith.constant 0 : i32
    %c0_i32_0 = arith.constant 0 : i32
    return %arg0, %c0_i32 : i32, i32
  }
  func.func @transform_1(%arg0: i32) -> (i32, i32) {
    %c0_i32 = arith.constant 0 : i32
    %c0_i32_0 = arith.constant 0 : i32
    return %arg0, %c0_i32 : i32, i32
  }
  func.func @transform_2(%arg0: i32) -> (i32, i32) {
    %c0_i32 = arith.constant 0 : i32
    %c0_i32_0 = arith.constant 0 : i32
    %c0_i32_1 = arith.constant 0 : i32
    return %c0_i32, %c0_i32_0 : i32, i32
  }
  func.func @transform_3(%arg0: i32) -> (i32, i32) {
    %c0_i32 = arith.constant 0 : i32
    %c0_i32_0 = arith.constant 0 : i32
    return %arg0, %c0_i32 : i32, i32
  }
}

</mosaic_0001>

<llo_original>
// kernel: tpu_custom_call.1
$region0: #{tpu_custom_call.1}
  #allocation0 [shape = 'u32[]', space=smem, size = 0x4, offset = 0x4, fixed_abs, tag = 'smem constant byte address 0x4 - core index']
  #allocation1 [shape = 'u32[144,128]{1,0:T(1,128)}', space=vmem, size = 0x12000, scoped, tag = 'internal scratch']
  %s0 = inlined_call_operand.vmem [shape: f32[8,12], index: 0, kind: input, shape index: {}]
  %s1 = inlined_call_operand.vmem [shape: f32[8,4], index: 1, kind: input, shape index: {}]
  %s2 = inlined_call_operand.vmem [shape: bf16[176,64], index: 2, kind: input, shape index: {}]
  %s3 = inlined_call_operand.vmem [shape: f32[8,2], index: 3, kind: output, shape index: {}]
  %s4 = sld [smem:[#allocation0]]
  $region22: #{tpu_custom_call.1} parent=0
    _
  %s6 = ssub.s32 1, %s4
  %s7 = scalar_select 0, %s6, %s4
  // Predicated region
  $region2: #{tpu_custom_call.1} parent=0 // pred_check
    _
  $region3: #{tpu_custom_call.1} parent=0 // pred_check_branch
    %9 = sbr.rel (0) target = $region5
  $region4: #{tpu_custom_call.1} parent=0 // pred_region
    _
  $region5: #{tpu_custom_call.1} parent=0 // pred_fallthru
    _
  // Predicated region
  $region6: #{tpu_custom_call.1} parent=0 // pred_check
    _
  $region7: #{tpu_custom_call.1} parent=0 // pred_check_branch
    %11 = sbr.rel (0) target = $region9
  $region8: #{tpu_custom_call.1} parent=0 // pred_region
    _
  $region9: #{tpu_custom_call.1} parent=0 // pred_fallthru
    _
  // Predicated region
  $region10: #{tpu_custom_call.1} parent=0 // pred_check
    _
  $region11: #{tpu_custom_call.1} parent=0 // pred_check_branch
    %13 = sbr.rel (0) target = $region13
  $region12: #{tpu_custom_call.1} parent=0 // pred_region
    _
  $region13: #{tpu_custom_call.1} parent=0 // pred_fallthru
    _
  %v15 = vld [vmem:[%s0] sm:$0xff]
  %v16 = vpack.c.bf16 %v15, %v15
  %v17 = vld [vmem:[%s1] sm:$0xff]
  %v18 = vpack.c.bf16 %v17, %v17
  %v19 = vld [vmem:[%s2] sm:$0xf]
  %v20 = vld [vmem:[%s2 + $0x4] sm:$0x3]
  %v21 = vld [vmem:[%s2 + $0x8] sm:$0x3]
  %v22 = vld [vmem:[%s2 + $0x10] sm:$0xf]
  %v23 = vld [vmem:[%s2 + $0x14] sm:$0xf]
  %v24 = vld [vmem:[%s2 + $0x18] sm:$0xf]
  %v25 = vld [vmem:[%s2 + $0x1c] sm:$0xf]
  %v26 = vld [vmem:[%s2 + $0x20] sm:$0xf]
  %v27 = vld [vmem:[%s2 + $0x24] sm:$0xf]
  %v28 = vld [vmem:[%s2 + $0x28] sm:$0xf]
  %v29 = vld [vmem:[%s2 + $0x2c] sm:$0xf]
  %v30 = vld [vmem:[%s2 + $0x30] sm:$0xf]
  %v31 = vld [vmem:[%s2 + $0x34] sm:$0xf]
  %v32 = vld [vmem:[%s2 + $0x38] sm:$0xf]
  %v33 = vld [vmem:[%s2 + $0x3c] sm:$0xf]
  %v34 = vld [vmem:[%s2 + $0x40] sm:$0xf]
  %v35 = vld [vmem:[%s2 + $0x44] sm:$0xf]
  %v36 = vld [vmem:[%s2 + $0x48] sm:$0xf]
  %v37 = vld [vmem:[%s2 + $0x4c] sm:$0xf]
  %v38 = vld [vmem:[%s2 + $0x50] sm:$0x3]
  %v39 = vunpack.c.l.bf16 %v38
  %vm40 = vcmask 31744
  %v42 = vsel %vm40, %v18, 0
  %vm44 = vcmask 1041408
  %v46 = vsel %vm44, %v21, 0
  %48 = vmatprep.subr.bf16.mxu0 0
  %49 = vmatpush1.bf16.msra.mxu0 %v46
  %50 = vmatprep.subr.bf16.mxu0 0
  %51 = vmatpush1.bf16.msra.mxu0 0
  %52 = vmatprep.subr.bf16.mxu0 0
  %53 = vmatpush1.bf16.msra.mxu0 0
  %54 = vmatprep.subr.bf16.mxu0 0
  %55 = vmatpush1.bf16.msra.mxu0 0
  %56 = vmatprep.subr.bf16.mxu0 0
  %57 = vmatpush1.bf16.msra.mxu0 0
  %58 = vmatprep.subr.bf16.mxu0 0
  %59 = vmatpush1.bf16.msra.mxu0 0
  %60 = vmatprep.subr.bf16.mxu0 0
  %61 = vmatpush1.bf16.msra.mxu0 0
  %62 = vmatprep.subr.bf16.mxu0 0
  %63 = vmatpush1.bf16.msra.mxu0 0
  %64 = vmatprep.subr.bf16.mxu0 0
  %65 = vmatpush1.bf16.msra.mxu0 0
  %66 = vmatprep.subr.bf16.mxu0 0
  %67 = vmatpush1.bf16.msra.mxu0 0
  %68 = vmatprep.subr.bf16.mxu0 0
  %69 = vmatpush1.bf16.msra.mxu0 0
  %70 = vmatprep.subr.bf16.mxu0 0
  %71 = vmatpush1.bf16.msra.mxu0 0
  %72 = vmatprep.subr.bf16.mxu0 0
  %73 = vmatpush1.bf16.msra.mxu0 0
  %74 = vmatprep.subr.bf16.mxu0 0
  %75 = vmatpush1.bf16.msra.mxu0 0
  %76 = vmatprep.subr.bf16.mxu0 0
  %77 = vmatpush1.bf16.msra.mxu0 0
  %78 = vmatprep.subr.bf16.mxu0 0
  %79 = vmatpush1.bf16.msra.mxu0 0
  %80 = vmatprep.mubr.bf16.mxu0 0
  %81 = vmatmul.mubr.bf16.gmra.mrb[0].mxu0 %v42
  %v82 = vpop.f32.mrb[0].mxu0
  %v83 = vadd.f32 0.0, %v82
  %v84 = vpop.f32.mrb[0].mxu0
  %v85 = vpop.f32.mrb[0].mxu0
  %v86 = vpop.f32.mrb[0].mxu0
  %87 = vdwg.mxu0
  %v90 = vunpack.c.l.b16 %v19
  %v91 = vunpack.c.l.b16 %v20
  %v92 = vpack.c.b16 %v91, %v90
  %vm93 = vcmask 97280
  %v95 = vsel %vm93, %v16, 0
  %vm97 = vcmask 1045504
  %v99 = vsel %vm97, %v92, 0
  %101 = vmatprep.subr.bf16.mxu0 0
  %102 = vmatpush1.bf16.msra.mxu0 %v99
  %103 = vmatprep.subr.bf16.mxu0 0
  %104 = vmatpush1.bf16.msra.mxu0 0
  %105 = vmatprep.subr.bf16.mxu0 0
  %106 = vmatpush1.bf16.msra.mxu0 0
  %107 = vmatprep.subr.bf16.mxu0 0
  %108 = vmatpush1.bf16.msra.mxu0 0
  %109 = vmatprep.subr.bf16.mxu0 0
  %110 = vmatpush1.bf16.msra.mxu0 0
  %111 = vmatprep.subr.bf16.mxu0 0
  %112 = vmatpush1.bf16.msra.mxu0 0
  %113 = vmatprep.subr.bf16.mxu0 0
  %114 = vmatpush1.bf16.msra.mxu0 0
  %115 = vmatprep.subr.bf16.mxu0 0
  %116 = vmatpush1.bf16.msra.mxu0 0
  %117 = vmatprep.subr.bf16.mxu0 0
  %118 = vmatpush1.bf16.msra.mxu0 0
  %119 = vmatprep.subr.bf16.mxu0 0
  %120 = vmatpush1.bf16.msra.mxu0 0
  %121 = vmatprep.subr.bf16.mxu0 0
  %122 = vmatpush1.bf16.msra.mxu0 0
  %123 = vmatprep.subr.bf16.mxu0 0
  %124 = vmatpush1.bf16.msra.mxu0 0
  %125 = vmatprep.subr.bf16.mxu0 0
  %126 = vmatpush1.bf16.msra.mxu0 0
  %127 = vmatprep.subr.bf16.mxu0 0
  %128 = vmatpush1.bf16.msra.mxu0 0
  %129 = vmatprep.subr.bf16.mxu0 0
  %130 = vmatpush1.bf16.msra.mxu0 0
  %131 = vmatprep.subr.bf16.mxu0 0
  %132 = vmatpush1.bf16.msra.mxu0 0
  %133 = vmatprep.mubr.bf16.mxu0 0
  %134 = vmatmul.mubr.bf16.gmra.mrb[0].mxu0 %v95
  %v135 = vpop.f32.mrb[0].mxu0
  %v136 = vadd.f32 %v83, %v135
  %v137 = vpop.f32.mrb[0].mxu0
  %v138 = vpop.f32.mrb[0].mxu0
  %v139 = vpop.f32.mrb[0].mxu0
  %140 = vdwg.mxu0
  %v141 = vlaneseq
  %v142 = vshrl.u32 %v141, 7
  %v143 = vsub.s32 0, %v142
  %v144 = vrot.slane %v39, %v143
  %v145 = vadd.f32 %v136, %v144
  %v146 = vmax.f32 %v145, 0.0
  %v147 = vpack.c.bf16 %v146, %v146
  %v148 = vlaneseq
  %v149 = vshrl.u32 %v148, 7
  %v150 = vsub.s32 1, %v149
  %v151 = vrot.slane %v39, %v150
  %v160 = vunpack.c.l.b16 %v22
  %v161 = vunpack.c.l.b16 %v23
  %v162 = vunpack.c.l.b16 %v24
  %v163 = vunpack.c.l.b16 %v25
  %v164 = vunpack.c.l.b16 %v26
  %v165 = vunpack.c.l.b16 %v27
  %v166 = vunpack.c.l.b16 %v28
  %v167 = vunpack.c.l.b16 %v29
  %v168 = vpack.c.b16 %v161, %v160
  %v169 = vpack.c.b16 %v163, %v162
  %v170 = vpack.c.b16 %v165, %v164
  %v171 = vpack.c.b16 %v167, %v166
  %vm176 = vcmask 523264
  %v178 = vsel %vm176, %v147, 0
  %180 = vmatprep.subr.bf16.mxu0 0
  %181 = vmatpush1.bf16.msra.mxu0 %v168
  %182 = vmatprep.subr.bf16.mxu0 0
  %183 = vmatpush1.bf16.msra.mxu0 %v169
  %184 = vmatprep.subr.bf16.mxu0 0
  %185 = vmatpush1.bf16.msra.mxu0 %v170
  %186 = vmatprep.subr.bf16.mxu0 0
  %187 = vmatpush1.bf16.msra.mxu0 %v171
  %188 = vmatprep.subr.bf16.mxu0 0
  %189 = vmatpush1.bf16.msra.mxu0 0
  %190 = vmatprep.subr.bf16.mxu0 0
  %191 = vmatpush1.bf16.msra.mxu0 0
  %192 = vmatprep.subr.bf16.mxu0 0
  %193 = vmatpush1.bf16.msra.mxu0 0
  %194 = vmatprep.subr.bf16.mxu0 0
  %195 = vmatpush1.bf16.msra.mxu0 0
  %196 = vmatprep.subr.bf16.mxu0 0
  %197 = vmatpush1.bf16.msra.mxu0 0
  %198 = vmatprep.subr.bf16.mxu0 0
  %199 = vmatpush1.bf16.msra.mxu0 0
  %200 = vmatprep.subr.bf16.mxu0 0
  %201 = vmatpush1.bf16.msra.mxu0 0
  %202 = vmatprep.subr.bf16.mxu0 0
  %203 = vmatpush1.bf16.msra.mxu0 0
  %204 = vmatprep.subr.bf16.mxu0 0
  %205 = vmatpush1.bf16.msra.mxu0 0
  %206 = vmatprep.subr.bf16.mxu0 0
  %207 = vmatpush1.bf16.msra.mxu0 0
  %208 = vmatprep.subr.bf16.mxu0 0
  %209 = vmatpush1.bf16.msra.mxu0 0
  %210 = vmatprep.subr.bf16.mxu0 0
  %211 = vmatpush1.bf16.msra.mxu0 0
  %212 = vmatprep.mubr.bf16.mxu0 0
  %213 = vmatmul.mubr.bf16.gmra.mrb[0].mxu0 %v178
  %v214 = vpop.f32.mrb[0].mxu0
  %v215 = vadd.f32 %v151, %v214
  %v216 = vpop.f32.mrb[0].mxu0
  %v217 = vpop.f32.mrb[0].mxu0
  %v218 = vpop.f32.mrb[0].mxu0
  %219 = vdwg.mxu0
  %v220 = vmax.f32 %v215, 0.0
  %v221 = vpack.c.bf16 %v220, %v220
  %v230 = vunpack.c.l.b16 %v30
  %v231 = vunpack.c.l.b16 %v31
  %v232 = vunpack.c.l.b16 %v32
  %v233 = vunpack.c.l.b16 %v33
  %v234 = vunpack.c.l.b16 %v34
  %v235 = vunpack.c.l.b16 %v35
  %v236 = vunpack.c.l.b16 %v36
  %v237 = vunpack.c.l.b16 %v37
  %v238 = vpack.c.b16 %v231, %v230
  %v239 = vpack.c.b16 %v233, %v232
  %v240 = vpack.c.b16 %v235, %v234
  %v241 = vpack.c.b16 %v237, %v236
  %v247 = vsel %vm176, %v221, 0
  %249 = vmatprep.subr.bf16.mxu0 0
  %250 = vmatpush1.bf16.msra.mxu0 %v238
  %251 = vmatprep.subr.bf16.mxu0 0
  %252 = vmatpush1.bf16.msra.mxu0 %v239
  %253 = vmatprep.subr.bf16.mxu0 0
  %254 = vmatpush1.bf16.msra.mxu0 %v240
  %255 = vmatprep.subr.bf16.mxu0 0
  %256 = vmatpush1.bf16.msra.mxu0 %v241
  %257 = vmatprep.subr.bf16.mxu0 0
  %258 = vmatpush1.bf16.msra.mxu0 0
  %259 = vmatprep.subr.bf16.mxu0 0
  %260 = vmatpush1.bf16.msra.mxu0 0
  %261 = vmatprep.subr.bf16.mxu0 0
  %262 = vmatpush1.bf16.msra.mxu0 0
  %263 = vmatprep.subr.bf16.mxu0 0
  %264 = vmatpush1.bf16.msra.mxu0 0
  %265 = vmatprep.subr.bf16.mxu0 0
  %266 = vmatpush1.bf16.msra.mxu0 0
  %267 = vmatprep.subr.bf16.mxu0 0
  %268 = vmatpush1.bf16.msra.mxu0 0
  %269 = vmatprep.subr.bf16.mxu0 0
  %270 = vmatpush1.bf16.msra.mxu0 0
  %271 = vmatprep.subr.bf16.mxu0 0
  %272 = vmatpush1.bf16.msra.mxu0 0
  %273 = vmatprep.subr.bf16.mxu0 0
  %274 = vmatpush1.bf16.msra.mxu0 0
  %275 = vmatprep.subr.bf16.mxu0 0
  %276 = vmatpush1.bf16.msra.mxu0 0
  %277 = vmatprep.subr.bf16.mxu0 0
  %278 = vmatpush1.bf16.msra.mxu0 0
  %279 = vmatprep.subr.bf16.mxu0 0
  %280 = vmatpush1.bf16.msra.mxu0 0
  %281 = vmatprep.mubr.bf16.mxu0 0
  %282 = vmatmul.mubr.bf16.gmra.mrb[0].mxu0 %v247
  %v283 = vpop.f32.mrb[0].mxu0
  %v284 = vadd.f32 0.0, %v283
  %v285 = vpop.f32.mrb[0].mxu0
  %v286 = vpop.f32.mrb[0].mxu0
  %v287 = vpop.f32.mrb[0].mxu0
  %288 = vdwg.mxu0
  %v289 = vlaneseq
  %v290 = vshrl.u32 %v289, 7
  %v291 = vsub.s32 2, %v290
  %v292 = vrot.slane %v39, %v291
  %v293 = vadd.f32 %v284, %v292
  %vm294 = vcmask 15360
  %295 = vst.msk [vmem:[%s3] sm:$0xff] %vm294, %v293
  // Predicated region
  $region14: #{tpu_custom_call.1} parent=0 // pred_check
    _
  $region15: #{tpu_custom_call.1} parent=0 // pred_check_branch
    %297 = sbr.rel (0) target = $region17
  $region16: #{tpu_custom_call.1} parent=0 // pred_region
    _
  $region17: #{tpu_custom_call.1} parent=0 // pred_fallthru
    _
  // Predicated region
  $region18: #{tpu_custom_call.1} parent=0 // pred_check
    _
  $region19: #{tpu_custom_call.1} parent=0 // pred_check_branch
    %299 = sbr.rel (0) target = $region21
  $region20: #{tpu_custom_call.1} parent=0 // pred_region
    _
  $region21: #{tpu_custom_call.1} parent=0 // pred_fallthru
    _

</llo_original>
